<compile_context>
chip_gen: v7x
topology: tpu7x:2x2x1
jax: 0.10.0
libtpu: 0.0.40
codegen_flags: <defaults>
</compile_context>

<pallas_src>
import functools

import jax
import jax.numpy as jnp
from jax.experimental import pallas as pl
from jax.experimental.pallas import tpu as pltpu


def _round_up(x, m):
    return ((x + m - 1) // m) * m


def _fused_floral_linear_kernel(apply_relu,
                                x_ref, w_ref, xa_ref, bcat_ref, bias_ref,
                                o_ref, acc_ref):
    """One (tm, tn) output tile of y = x@W + xa@B_cat + bias (+ optional ReLU)."""
    k = pl.program_id(2)

    @pl.when(k == 0)
    def _():
        acc_ref[...] = jnp.zeros_like(acc_ref)

    # Main base-weight matmul, accumulated over the K grid axis (MXU, f32 acc).
    acc_ref[...] += jnp.dot(x_ref[...], w_ref[...],
                            preferred_element_type=jnp.float32)

    @pl.when(k == pl.num_programs(2) - 1)
    def _():
        acc = acc_ref[...]
        # LoRA up-projection: xa already has alpha*probs folded into B_cat.
        acc = acc + jnp.dot(xa_ref[...], bcat_ref[...],
                            preferred_element_type=jnp.float32)
        acc = acc + bias_ref[...]                      # base bias + folded LoRA biases
        if apply_relu:
            acc = jnp.maximum(acc, 0.0)                # fused inter-layer ReLU
        o_ref[...] = acc.astype(o_ref.dtype)


def floral_linear(x, w, b, lora_a, lora_b, lora_bias, probs, *, alpha=1.0,
                  apply_relu=False, tm=256, tn=512, tk=512):
    """One LoRA-wrapped Linear layer of the Floral model.

    x:        (M, K)      activations
    w:        (K, N)      base weight (transposed vs. torch)
    b:        (1, N)      base bias
    lora_a:   (C, K, r)   expert down-projections
    lora_b:   (C, r, N)   expert up-projections
    lora_bias:(C, N)      expert biases (Floral bias=True)
    probs:    (C,)        router mixture weights
    """
    M, K = x.shape
    Kw, N = w.shape
    C, Ka, r = lora_a.shape
    assert Kw == K and Ka == K and lora_b.shape == (C, r, N)
    Cr = C * r
    dtype = x.dtype

    # ---- wrapper-side folding (O(C*r*N), O(C*N): negligible) ---------------
    scale = (alpha * probs).astype(jnp.float32)                         # (C,)
    a_cat = jnp.transpose(lora_a, (1, 0, 2)).reshape(K, Cr)             # (K, C*r)
    b_cat = (lora_b.astype(jnp.float32) * scale[:, None, None]
             ).reshape(Cr, N).astype(dtype)                             # (C*r, N), pre-scaled
    bias = (b.astype(jnp.float32)
            + jnp.einsum('c,cn->n', scale,
                         lora_bias.astype(jnp.float32))[None, :])       # (1, N) f32

    # Hoist the rank projection out of the N/K tile loops: xa is tiny (M, C*r).
    xa = jnp.dot(x, a_cat.astype(dtype),
                 preferred_element_type=jnp.float32).astype(dtype)

    # ---- tile sizing + zero padding (zeros are exact for matmul) -----------
    tm = min(tm, _round_up(M, 8))
    tn = min(tn, _round_up(N, 128))
    tk = min(tk, _round_up(K, 128))
    Mp, Np, Kp = _round_up(M, tm), _round_up(N, tn), _round_up(K, tk)

    def pad2(a, s0, s1):
        p0, p1 = s0 - a.shape[0], s1 - a.shape[1]
        if p0 or p1:
            a = jnp.pad(a, ((0, p0), (0, p1)))
        return a

    xp = pad2(x, Mp, Kp)
    wp = pad2(w, Kp, Np)
    xap = pad2(xa, Mp, Cr)
    bcatp = pad2(b_cat, Cr, Np)
    biasp = pad2(bias, 1, Np)

    grid = (Mp // tm, Np // tn, Kp // tk)
    kernel = functools.partial(_fused_floral_linear_kernel, bool(apply_relu))

    out = pl.pallas_call(
        kernel,
        out_shape=jax.ShapeDtypeStruct((Mp, Np), dtype),
        grid=grid,
        in_specs=[
            pl.BlockSpec((tm, tk), lambda i, j, k: (i, k)),   # x
            pl.BlockSpec((tk, tn), lambda i, j, k: (k, j)),   # W
            pl.BlockSpec((tm, Cr), lambda i, j, k: (i, 0)),   # xa   (full C*r dim)
            pl.BlockSpec((Cr, tn), lambda i, j, k: (0, j)),   # B_cat (pre-scaled)
            pl.BlockSpec((1, tn), lambda i, j, k: (0, j)),    # folded bias
        ],
        out_specs=pl.BlockSpec((tm, tn), lambda i, j, k: (i, j)),
        scratch_shapes=[pltpu.VMEM((tm, tn), jnp.float32)],
        compiler_params=pltpu.CompilerParams(
            dimension_semantics=("parallel", "parallel", "arbitrary")),
    )(xp, wp, xap, bcatp, biasp)

    return out[:M, :N]


# ----------------------------------------------------------------------------
# Floral model: router + MLP base model; every Linear is wrapped with a
# LoRAList of `num_clusters` LinearLoRA experts (forward-hook addition).
# The inter-layer ReLU is fused into the kernel epilogue.
# ----------------------------------------------------------------------------
def floral_forward(x, params, *, alpha=1.0):
    # Router: self.router.reset(); self.router() -> softmax over cluster logits.
    probs = jax.nn.softmax(params["router_logits"].astype(jnp.float32))
    h = x
    n_layers = len(params["layers"])
    for li, layer in enumerate(params["layers"]):
        h = floral_linear(h, layer["w"], layer["b"],
                          layer["lora_a"], layer["lora_b"], layer["lora_bias"],
                          probs, alpha=alpha,
                          apply_relu=(li < n_layers - 1))
    return h


def floral_forward_ref(x, params, *, alpha=1.0):
    """Pure-JAX reference for verification."""
    probs = jax.nn.softmax(params["router_logits"].astype(jnp.float32))
    h = x
    n_layers = len(params["layers"])
    for li, layer in enumerate(params["layers"]):
        base = h @ layer["w"] + layer["b"][0]
        lora = (jnp.einsum("mk,ckr,crn->cmn", h, layer["lora_a"], layer["lora_b"])
                + layer["lora_bias"][:, None, :])
        h = base + alpha * jnp.einsum("c,cmn->mn", probs, lora)
        if li < n_layers - 1:
            h = jax.nn.relu(h)
    return h


def init_params(key, *, dims=(128, 192, 128), num_clusters=2, rank=4):
    # TODO(synk): the exact LinearLoRA rank formula (float `rank` ratio + min_rank)
    # lives in the unprovided LoRA classes; a fixed small rank is used here.
    params = {"layers": []}
    key, kr = jax.random.split(key)
    params["router_logits"] = jax.random.normal(kr, (num_clusters,), jnp.float32)
    for k_in, k_out in zip(dims[:-1], dims[1:]):
        key, kw, kb, ka, kb2, klb = jax.random.split(key, 6)
        layer = {
            "w": jax.random.normal(kw, (k_in, k_out), jnp.float32) * 0.05,
            "b": jax.random.normal(kb, (1, k_out), jnp.float32) * 0.05,
            "lora_a": jax.random.normal(ka, (num_clusters, k_in, rank), jnp.float32) * 0.05,
            "lora_b": jax.random.normal(kb2, (num_clusters, rank, k_out), jnp.float32) * 0.05,
            "lora_bias": jax.random.normal(klb, (num_clusters, k_out), jnp.float32) * 0.05,
        }
        params["layers"].append(layer)
    return params


if __name__ == "__main__":
    key = jax.random.PRNGKey(0)
    key, kx = jax.random.split(key)

    # Small shapes that also exercise the ragged-M / ragged-N padding path.
    batch, d_in = 10, 128
    params = init_params(key, dims=(d_in, 192, 128), num_clusters=2, rank=4)
    x = jax.random.normal(kx, (batch, d_in), jnp.float32)

    out = floral_forward(x, params, alpha=1.0)
    out = jax.block_until_ready(out)

    ref = floral_forward_ref(x, params, alpha=1.0)
    assert out.shape == ref.shape == (batch, 128)
    assert jnp.allclose(out, ref, rtol=1e-4, atol=1e-4), "mismatch vs pure-JAX reference"

    print("KERNEL_OK")
</pallas_src>

<mosaic_0001>
module attributes {stable_mosaic.version = 11 : i64} {
  func.func @_fused_floral_linear_kernel(%arg0: i32, %arg1: i32, %arg2: i32, %arg3: memref<16x128xf32, #tpu.memory_space<vmem>>, %arg4: memref<128x256xf32, #tpu.memory_space<vmem>>, %arg5: memref<16x8xf32, #tpu.memory_space<vmem>>, %arg6: memref<8x256xf32, #tpu.memory_space<vmem>>, %arg7: memref<1x256xf32, #tpu.memory_space<vmem>>, %arg8: memref<16x256xf32, #tpu.memory_space<vmem>>, %arg9: memref<16x256xf32, #tpu.memory_space<vmem>>) attributes {dimension_semantics = [#tpu.dimension_semantics<parallel>, #tpu.dimension_semantics<parallel>, #tpu.dimension_semantics<arbitrary>], iteration_bounds = array<i64: 1, 1, 1>, scalar_prefetch = 0 : i64, scratch_operands = 1 : i64, tpu.core_type = #tpu.core_type<tc>, window_params = [{transform_indices = @transform_0, window_bounds = array<i64: 16, 128>}, {transform_indices = @transform_1, window_bounds = array<i64: 128, 256>}, {transform_indices = @transform_2, window_bounds = array<i64: 16, 8>}, {transform_indices = @transform_3, window_bounds = array<i64: 8, 256>}, {transform_indices = @transform_4, window_bounds = array<i64: 1, 256>}, {transform_indices = @transform_5, window_bounds = array<i64: 16, 256>}]} {
    %c0_i32 = arith.constant 0 : i32
    %0 = arith.cmpi eq, %arg2, %c0_i32 : i32
    %1 = arith.extui %0 : i1 to i32
    %c0_i32_0 = arith.constant 0 : i32
    %2 = arith.cmpi ne, %1, %c0_i32_0 : i32
    scf.if %2 {
      %cst_10 = arith.constant 0.000000e+00 : f32
      %12 = vector.broadcast %cst_10 : f32 to vector<16x256xf32>
      %c0_11 = arith.constant 0 : index
      %c0_12 = arith.constant 0 : index
      %13 = vector.load %arg9[%c0_11, %c0_12] : memref<16x256xf32, #tpu.memory_space<vmem>>, vector<16x256xf32>
      tpu.vector_store %arg9[%c0_11, %c0_12], %12 {strides = array<i32>} : memref<16x256xf32, #tpu.memory_space<vmem>>, vector<16x256xf32>,
    } else {
    }
    %c0 = arith.constant 0 : index
    %c0_1 = arith.constant 0 : index
    %3 = vector.load %arg9[%c0, %c0_1] : memref<16x256xf32, #tpu.memory_space<vmem>>, vector<16x256xf32>
    %c0_2 = arith.constant 0 : index
    %c0_3 = arith.constant 0 : index
    %4 = vector.load %arg3[%c0_2, %c0_3] : memref<16x128xf32, #tpu.memory_space<vmem>>, vector<16x128xf32>
    %c0_4 = arith.constant 0 : index
    %c0_5 = arith.constant 0 : index
    %5 = vector.load %arg4[%c0_4, %c0_5] : memref<128x256xf32, #tpu.memory_space<vmem>>, vector<128x256xf32>
    %cst = arith.constant dense<0.000000e+00> : vector<16x256xf32>
    %6 = tpu.matmul %4, %5, %cst {dimension_numbers = #tpu.dot_dimension_numbers<[1], [0], [0], [1], [0, 0, 1, 1], [], []>} : vector<16x128xf32>, vector<128x256xf32>, vector<16x256xf32> -> vector<16x256xf32>
    %7 = arith.addf %3, %6 : vector<16x256xf32>
    %c0_6 = arith.constant 0 : index
    %c0_7 = arith.constant 0 : index
    %8 = vector.load %arg9[%c0_6, %c0_7] : memref<16x256xf32, #tpu.memory_space<vmem>>, vector<16x256xf32>
    tpu.vector_store %arg9[%c0_6, %c0_7], %7 {strides = array<i32>} : memref<16x256xf32, #tpu.memory_space<vmem>>, vector<16x256xf32>,
    %c0_i32_8 = arith.constant 0 : i32
    %9 = arith.cmpi eq, %arg2, %c0_i32_8 : i32
    %10 = arith.extui %9 : i1 to i32
    %c0_i32_9 = arith.constant 0 : i32
    %11 = arith.cmpi ne, %10, %c0_i32_9 : i32
    scf.if %11 {
      %c0_10 = arith.constant 0 : index
      %c0_11 = arith.constant 0 : index
      %12 = vector.load %arg9[%c0_10, %c0_11] : memref<16x256xf32, #tpu.memory_space<vmem>>, vector<16x256xf32>
      %c0_12 = arith.constant 0 : index
      %c0_13 = arith.constant 0 : index
      %13 = vector.load %arg5[%c0_12, %c0_13] : memref<16x8xf32, #tpu.memory_space<vmem>>, vector<16x8xf32>
      %c0_14 = arith.constant 0 : index
      %c0_15 = arith.constant 0 : index
      %14 = vector.load %arg6[%c0_14, %c0_15] : memref<8x256xf32, #tpu.memory_space<vmem>>, vector<8x256xf32>
      %cst_16 = arith.constant dense<0.000000e+00> : vector<16x256xf32>
      %15 = tpu.matmul %13, %14, %cst_16 {dimension_numbers = #tpu.dot_dimension_numbers<[1], [0], [0], [1], [0, 0, 1, 1], [], []>} : vector<16x8xf32>, vector<8x256xf32>, vector<16x256xf32> -> vector<16x256xf32>
      %16 = arith.addf %12, %15 : vector<16x256xf32>
      %c0_17 = arith.constant 0 : index
      %c0_18 = arith.constant 0 : index
      %17 = vector.load %arg7[%c0_17, %c0_18] : memref<1x256xf32, #tpu.memory_space<vmem>>, vector<1x256xf32>
      %18 = vector.broadcast %17 : vector<1x256xf32> to vector<16x256xf32>
      %19 = arith.addf %16, %18 : vector<16x256xf32>
      %cst_19 = arith.constant 0.000000e+00 : f32
      %20 = vector.broadcast %cst_19 : f32 to vector<16x256xf32>
      %21 = arith.maximumf %19, %20 : vector<16x256xf32>
      %c0_20 = arith.constant 0 : index
      %c0_21 = arith.constant 0 : index
      %22 = vector.load %arg8[%c0_20, %c0_21] : memref<16x256xf32, #tpu.memory_space<vmem>>, vector<16x256xf32>
      tpu.vector_store %arg8[%c0_20, %c0_21], %21 {strides = array<i32>} : memref<16x256xf32, #tpu.memory_space<vmem>>, vector<16x256xf32>,
    } else {
    }
    return
  }
  func.func @transform_0(%arg0: i32, %arg1: i32, %arg2: i32) -> (i32, i32) {
    %c0_i32 = arith.constant 0 : i32
    return %arg0, %arg2 : i32, i32
  }
  func.func @transform_1(%arg0: i32, %arg1: i32, %arg2: i32) -> (i32, i32) {
    %c0_i32 = arith.constant 0 : i32
    return %arg2, %arg1 : i32, i32
  }
  func.func @transform_2(%arg0: i32, %arg1: i32, %arg2: i32) -> (i32, i32) {
    %c0_i32 = arith.constant 0 : i32
    %c0_i32_0 = arith.constant 0 : i32
    return %arg0, %c0_i32 : i32, i32
  }
  func.func @transform_3(%arg0: i32, %arg1: i32, %arg2: i32) -> (i32, i32) {
    %c0_i32 = arith.constant 0 : i32
    %c0_i32_0 = arith.constant 0 : i32
    return %c0_i32, %arg1 : i32, i32
  }
  func.func @transform_4(%arg0: i32, %arg1: i32, %arg2: i32) -> (i32, i32) {
    %c0_i32 = arith.constant 0 : i32
    %c0_i32_0 = arith.constant 0 : i32
    return %c0_i32, %arg1 : i32, i32
  }
  func.func @transform_5(%arg0: i32, %arg1: i32, %arg2: i32) -> (i32, i32) {
    %c0_i32 = arith.constant 0 : i32
    return %arg0, %arg1 : i32, i32
  }
}

</mosaic_0001>

<llo_original>
// kernel: tpu_custom_call.1
$region0: #{tpu_custom_call.1}
  #allocation0 [shape = 'u32[]', space=smem, size = 0x4, offset = 0x4, fixed_abs, tag = 'smem constant byte address 0x4 - core index']
  #allocation1 [shape = 'u32[144,128]{1,0:T(1,128)}', space=vmem, size = 0x12000, scoped, tag = 'internal scratch']
  #allocation2 [shape = 'f32[16,256]{1,0:T(8,128)}', space=vmem, size = 0x4000, scoped, tag = 'scratch operand']
  %s0 = inlined_call_operand.vmem [shape: f32[16,128], index: 0, kind: input, shape index: {}]
  %s1 = inlined_call_operand.hbm [shape: f32[128,256], index: 1, kind: input, shape index: {}]
  %s2 = inlined_call_operand.vmem [shape: f32[16,8], index: 2, kind: input, shape index: {}]
  %s3 = inlined_call_operand.vmem [shape: f32[8,256], index: 3, kind: input, shape index: {}]
  %s4 = inlined_call_operand.vmem [shape: f32[1,256], index: 4, kind: input, shape index: {}]
  %s5 = inlined_call_operand.hbm [shape: f32[16,256], index: 5, kind: output, shape index: {}]
  %s6 = sld [smem:[#allocation0]]
  $region42: #{tpu_custom_call.1} parent=0
    _
  %s8 = ssub.s32 1, %s6
  %s9 = scalar_select 0, %s8, %s6
  $region1: #{tpu_custom_call.1} parent=0
    #allocation3 [shape = 'u8[131072]{0}', space=vmem, size = 0x20000, scoped, tag = 'input window, operand 1, single buffered']
    #allocation4 [shape = 's32[1]{0}', space=sflag, size = 0x4, scoped, tag = 'scoped memory for tpu_custom_call.1']
    #allocation5 [shape = 's32[1]{0}', space=sflag, size = 0x4, scoped, tag = 'scoped memory for tpu_custom_call.1']
    #allocation6 [shape = 'u8[16384]{0}', space=vmem, size = 0x4000, scoped, tag = 'output window, operand 0, single buffered']
    %10 = vsyncpa [#allocation4], 0
    %11 = vsyncpa [#allocation5], 0
    // Predicated region
    $region2: #{tpu_custom_call.1} parent=1 // pred_check
      _
    $region3: #{tpu_custom_call.1} parent=1 // pred_check_branch
      %13 = sbr.rel (0) target = $region5
    $region4: #{tpu_custom_call.1} parent=1 // pred_region
      _
    $region5: #{tpu_custom_call.1} parent=1 // pred_fallthru
      _
    // Predicated region
    $region6: #{tpu_custom_call.1} parent=1 // pred_check
      _
    $region7: #{tpu_custom_call.1} parent=1 // pred_check_branch
      %15 = sbr.rel (0) target = $region9
    $region8: #{tpu_custom_call.1} parent=1 // pred_region
      %s17 = ssub.s32 4096, 4096
      %18 = vsyncadd [#allocation4], %s17
      %s19 = sshll.u32 [#allocation3], 4
      %s20 = int_to_ptr.vmem [resolvable:$true] %s19
      %25 = dma.hbm_to_vmem [thread:$0]  %s1, 4096, %s20, [#allocation4], 256, 256, 16
    $region9: #{tpu_custom_call.1} parent=1 // pred_fallthru
      _
    // Predicated region
    $region10: #{tpu_custom_call.1} parent=1 // pred_check
      _
    $region11: #{tpu_custom_call.1} parent=1 // pred_check_branch
      %27 = sbr.rel (0) target = $region13
    $region12: #{tpu_custom_call.1} parent=1 // pred_region
      _
    $region13: #{tpu_custom_call.1} parent=1 // pred_fallthru
      _
    // Predicated region
    $region14: #{tpu_custom_call.1} parent=1 // pred_check
      _
    $region15: #{tpu_custom_call.1} parent=1 // pred_check_branch
      %29 = sbr.rel (0) target = $region17
    $region16: #{tpu_custom_call.1} parent=1 // pred_region
      _
    $region17: #{tpu_custom_call.1} parent=1 // pred_fallthru
      _
    // Predicated region
    $region18: #{tpu_custom_call.1} parent=1 // pred_check
      _
    $region19: #{tpu_custom_call.1} parent=1 // pred_check_branch
      %31 = sbr.rel (0) target = $region21
    $region20: #{tpu_custom_call.1} parent=1 // pred_region
      _
    $region21: #{tpu_custom_call.1} parent=1 // pred_fallthru
      _
    // Predicated region
    $region22: #{tpu_custom_call.1} parent=1 // pred_check
      _
    $region23: #{tpu_custom_call.1} parent=1 // pred_check_branch
      %33 = sbr.rel (0) target = $region25
    $region24: #{tpu_custom_call.1} parent=1 // pred_region
      %34 = dma.done [#allocation4], 4096
    $region25: #{tpu_custom_call.1} parent=1 // pred_fallthru
      _
    %p35 = scmp.eq.s32.totalorder 0, 0
    // Predicated region
    $region26: #{tpu_custom_call.1} parent=1 // pred_check
      %p36 = pneg %p35
    $region27: #{tpu_custom_call.1} parent=1 // pred_check_branch
      %38 = sbr.rel (%p36) target = $region29
    $region28: #{tpu_custom_call.1} parent=1 // pred_region
      %39 = vst [vmem:[#allocation2] sm:$0xff] 0.0
      %40 = vst [vmem:[#allocation2 + $0x8] sm:$0xff] 0.0
      %41 = vst [vmem:[#allocation2 + $0x10] sm:$0xff] 0.0
      %42 = vst [vmem:[#allocation2 + $0x18] sm:$0xff] 0.0
    $region29: #{tpu_custom_call.1} parent=1 // pred_fallthru
      _
    %v43 = vld [vmem:[#allocation2] sm:$0xff]
    %v44 = vld [vmem:[#allocation2 + $0x8] sm:$0xff]
    %v45 = vld [vmem:[#allocation2 + $0x10] sm:$0xff]
    %v46 = vld [vmem:[#allocation2 + $0x18] sm:$0xff]
    %v47 = vld [vmem:[%s0] sm:$0xff]
    %v48 = vld [vmem:[%s0 + $0x8] sm:$0xff]
    %v49 = vld [vmem:[#allocation3] sm:$0xff]
    %v50 = vld [vmem:[#allocation3 + $0x8] sm:$0xff]
    %v51 = vld [vmem:[#allocation3 + $0x10] sm:$0xff]
    %v52 = vld [vmem:[#allocation3 + $0x18] sm:$0xff]
    %v53 = vld [vmem:[#allocation3 + $0x20] sm:$0xff]
    %v54 = vld [vmem:[#allocation3 + $0x28] sm:$0xff]
    %v55 = vld [vmem:[#allocation3 + $0x30] sm:$0xff]
    %v56 = vld [vmem:[#allocation3 + $0x38] sm:$0xff]
    %v57 = vld [vmem:[#allocation3 + $0x40] sm:$0xff]
    %v58 = vld [vmem:[#allocation3 + $0x48] sm:$0xff]
    %v59 = vld [vmem:[#allocation3 + $0x50] sm:$0xff]
    %v60 = vld [vmem:[#allocation3 + $0x58] sm:$0xff]
    %v61 = vld [vmem:[#allocation3 + $0x60] sm:$0xff]
    %v62 = vld [vmem:[#allocation3 + $0x68] sm:$0xff]
    %v63 = vld [vmem:[#allocation3 + $0x70] sm:$0xff]
    %v64 = vld [vmem:[#allocation3 + $0x78] sm:$0xff]
    %v65 = vld [vmem:[#allocation3 + $0x80] sm:$0xff]
    %v66 = vld [vmem:[#allocation3 + $0x88] sm:$0xff]
    %v67 = vld [vmem:[#allocation3 + $0x90] sm:$0xff]
    %v68 = vld [vmem:[#allocation3 + $0x98] sm:$0xff]
    %v69 = vld [vmem:[#allocation3 + $0xa0] sm:$0xff]
    %v70 = vld [vmem:[#allocation3 + $0xa8] sm:$0xff]
    %v71 = vld [vmem:[#allocation3 + $0xb0] sm:$0xff]
    %v72 = vld [vmem:[#allocation3 + $0xb8] sm:$0xff]
    %v73 = vld [vmem:[#allocation3 + $0xc0] sm:$0xff]
    %v74 = vld [vmem:[#allocation3 + $0xc8] sm:$0xff]
    %v75 = vld [vmem:[#allocation3 + $0xd0] sm:$0xff]
    %v76 = vld [vmem:[#allocation3 + $0xd8] sm:$0xff]
    %v77 = vld [vmem:[#allocation3 + $0xe0] sm:$0xff]
    %v78 = vld [vmem:[#allocation3 + $0xe8] sm:$0xff]
    %v79 = vld [vmem:[#allocation3 + $0xf0] sm:$0xff]
    %v80 = vld [vmem:[#allocation3 + $0xf8] sm:$0xff]
    %81 = vmatprep.subr.mxu0 %v50
    %82 = vmatpush1.msra.mxu0 %v49
    %83 = vmatprep.subr.mxu0 %v52
    %84 = vmatpush1.msra.mxu0 %v51
    %85 = vmatprep.subr.mxu0 %v54
    %86 = vmatpush1.msra.mxu0 %v53
    %87 = vmatprep.subr.mxu0 %v56
    %88 = vmatpush1.msra.mxu0 %v55
    %89 = vmatprep.subr.mxu0 %v58
    %90 = vmatpush1.msra.mxu0 %v57
    %91 = vmatprep.subr.mxu0 %v60
    %92 = vmatpush1.msra.mxu0 %v59
    %93 = vmatprep.subr.mxu0 %v62
    %94 = vmatpush1.msra.mxu0 %v61
    %95 = vmatprep.subr.mxu0 %v64
    %96 = vmatpush1.msra.mxu0 %v63
    %97 = vmatprep.subr.mxu0 %v66
    %98 = vmatpush1.msra.mxu0 %v65
    %99 = vmatprep.subr.mxu0 %v68
    %100 = vmatpush1.msra.mxu0 %v67
    %101 = vmatprep.subr.mxu0 %v70
    %102 = vmatpush1.msra.mxu0 %v69
    %103 = vmatprep.subr.mxu0 %v72
    %104 = vmatpush1.msra.mxu0 %v71
    %105 = vmatprep.subr.mxu0 %v74
    %106 = vmatpush1.msra.mxu0 %v73
    %107 = vmatprep.subr.mxu0 %v76
    %108 = vmatpush1.msra.mxu0 %v75
    %109 = vmatprep.subr.mxu0 %v78
    %110 = vmatpush1.msra.mxu0 %v77
    %111 = vmatprep.subr.mxu0 %v80
    %112 = vmatpush1.msra.mxu0 %v79
    %113 = vmatprep.subr.mxu0 0.0
    %114 = vmatpush1.msra.mxu0 0.0
    %115 = vmatprep.subr.mxu0 0.0
    %116 = vmatpush1.msra.mxu0 0.0
    %117 = vmatprep.subr.mxu0 0.0
    %118 = vmatpush1.msra.mxu0 0.0
    %119 = vmatprep.subr.mxu0 0.0
    %120 = vmatpush1.msra.mxu0 0.0
    %121 = vmatprep.subr.mxu0 0.0
    %122 = vmatpush1.msra.mxu0 0.0
    %123 = vmatprep.subr.mxu0 0.0
    %124 = vmatpush1.msra.mxu0 0.0
    %125 = vmatprep.subr.mxu0 0.0
    %126 = vmatpush1.msra.mxu0 0.0
    %127 = vmatprep.subr.mxu0 0.0
    %128 = vmatpush1.msra.mxu0 0.0
    %129 = vmatprep.subr.mxu0 0.0
    %130 = vmatpush1.msra.mxu0 0.0
    %131 = vmatprep.subr.mxu0 0.0
    %132 = vmatpush1.msra.mxu0 0.0
    %133 = vmatprep.subr.mxu0 0.0
    %134 = vmatpush1.msra.mxu0 0.0
    %135 = vmatprep.subr.mxu0 0.0
    %136 = vmatpush1.msra.mxu0 0.0
    %137 = vmatprep.subr.mxu0 0.0
    %138 = vmatpush1.msra.mxu0 0.0
    %139 = vmatprep.subr.mxu0 0.0
    %140 = vmatpush1.msra.mxu0 0.0
    %141 = vmatprep.subr.mxu0 0.0
    %142 = vmatpush1.msra.mxu0 0.0
    %143 = vmatprep.subr.mxu0 0.0
    %144 = vmatpush1.msra.mxu0 0.0
    %145 = vmatprep.mubr.f32.mxu0 0.0
    %146 = vmatmul.mubr.f32.gmra.mrb[0].mxu0 %v47
    %v147 = vpop.f32.mrb[0].mxu0
    %v148 = vadd.f32 0.0, %v147
    %v149 = vpop.f32.mrb[0].mxu0
    %v150 = vadd.f32 0.0, %v149
    %151 = vmatprep.mubr.f32.mxu0 0.0
    %152 = vmatmul.mubr.f32.gmra.mrb[0].mxu0 %v48
    %v153 = vpop.f32.mrb[0].mxu0
    %v154 = vadd.f32 0.0, %v153
    %v155 = vpop.f32.mrb[0].mxu0
    %v156 = vadd.f32 0.0, %v155
    %157 = vdwg.mxu0
    %v158 = vadd.f32 %v43, %v148
    %v159 = vadd.f32 %v44, %v150
    %v160 = vadd.f32 %v45, %v154
    %v161 = vadd.f32 %v46, %v156
    %162 = vst [vmem:[#allocation2] sm:$0xff] %v158
    %163 = vst [vmem:[#allocation2 + $0x8] sm:$0xff] %v159
    %164 = vst [vmem:[#allocation2 + $0x10] sm:$0xff] %v160
    %165 = vst [vmem:[#allocation2 + $0x18] sm:$0xff] %v161
    // Predicated region
    $region30: #{tpu_custom_call.1} parent=1 // pred_check
      %p166 = pneg %p35
    $region31: #{tpu_custom_call.1} parent=1 // pred_check_branch
      %168 = sbr.rel (%p166) target = $region33
    $region32: #{tpu_custom_call.1} parent=1 // pred_region
      %v169 = vld [vmem:[#allocation2] sm:$0xff]
      %v170 = vld [vmem:[#allocation2 + $0x8] sm:$0xff]
      %v171 = vld [vmem:[#allocation2 + $0x10] sm:$0xff]
      %v172 = vld [vmem:[#allocation2 + $0x18] sm:$0xff]
      %v173 = vld [vmem:[%s2] sm:$0xff]
      %v174 = vld [vmem:[%s2 + $0x8] sm:$0xff]
      %v175 = vld [vmem:[%s3] sm:$0xff]
      %v176 = vld [vmem:[%s3 + $0x8] sm:$0xff]
      %vm177 = vcmask 64512
      %v179 = vsel %vm177, %v173, 0
      %v182 = vsel %vm177, %v174, 0
      %184 = vmatprep.subr.mxu0 %v176
      %185 = vmatpush1.msra.mxu0 %v175
      %186 = vmatprep.subr.mxu0 0.0
      %187 = vmatpush1.msra.mxu0 0.0
      %188 = vmatprep.subr.mxu0 0.0
      %189 = vmatpush1.msra.mxu0 0.0
      %190 = vmatprep.subr.mxu0 0.0
      %191 = vmatpush1.msra.mxu0 0.0
      %192 = vmatprep.subr.mxu0 0.0
      %193 = vmatpush1.msra.mxu0 0.0
      %194 = vmatprep.subr.mxu0 0.0
      %195 = vmatpush1.msra.mxu0 0.0
      %196 = vmatprep.subr.mxu0 0.0
      %197 = vmatpush1.msra.mxu0 0.0
      %198 = vmatprep.subr.mxu0 0.0
      %199 = vmatpush1.msra.mxu0 0.0
      %200 = vmatprep.subr.mxu0 0.0
      %201 = vmatpush1.msra.mxu0 0.0
      %202 = vmatprep.subr.mxu0 0.0
      %203 = vmatpush1.msra.mxu0 0.0
      %204 = vmatprep.subr.mxu0 0.0
      %205 = vmatpush1.msra.mxu0 0.0
      %206 = vmatprep.subr.mxu0 0.0
      %207 = vmatpush1.msra.mxu0 0.0
      %208 = vmatprep.subr.mxu0 0.0
      %209 = vmatpush1.msra.mxu0 0.0
      %210 = vmatprep.subr.mxu0 0.0
      %211 = vmatpush1.msra.mxu0 0.0
      %212 = vmatprep.subr.mxu0 0.0
      %213 = vmatpush1.msra.mxu0 0.0
      %214 = vmatprep.subr.mxu0 0.0
      %215 = vmatpush1.msra.mxu0 0.0
      %216 = vmatprep.subr.mxu0 0.0
      %217 = vmatpush1.msra.mxu0 0.0
      %218 = vmatprep.subr.mxu0 0.0
      %219 = vmatpush1.msra.mxu0 0.0
      %220 = vmatprep.subr.mxu0 0.0
      %221 = vmatpush1.msra.mxu0 0.0
      %222 = vmatprep.subr.mxu0 0.0
      %223 = vmatpush1.msra.mxu0 0.0
      %224 = vmatprep.subr.mxu0 0.0
      %225 = vmatpush1.msra.mxu0 0.0
      %226 = vmatprep.subr.mxu0 0.0
      %227 = vmatpush1.msra.mxu0 0.0
      %228 = vmatprep.subr.mxu0 0.0
      %229 = vmatpush1.msra.mxu0 0.0
      %230 = vmatprep.subr.mxu0 0.0
      %231 = vmatpush1.msra.mxu0 0.0
      %232 = vmatprep.subr.mxu0 0.0
      %233 = vmatpush1.msra.mxu0 0.0
      %234 = vmatprep.subr.mxu0 0.0
      %235 = vmatpush1.msra.mxu0 0.0
      %236 = vmatprep.subr.mxu0 0.0
      %237 = vmatpush1.msra.mxu0 0.0
      %238 = vmatprep.subr.mxu0 0.0
      %239 = vmatpush1.msra.mxu0 0.0
      %240 = vmatprep.subr.mxu0 0.0
      %241 = vmatpush1.msra.mxu0 0.0
      %242 = vmatprep.subr.mxu0 0.0
      %243 = vmatpush1.msra.mxu0 0.0
      %244 = vmatprep.subr.mxu0 0.0
      %245 = vmatpush1.msra.mxu0 0.0
      %246 = vmatprep.subr.mxu0 0.0
      %247 = vmatpush1.msra.mxu0 0.0
      %248 = vmatprep.mubr.f32.mxu0 0.0
      %249 = vmatmul.mubr.f32.gmra.mrb[0].mxu0 %v179
      %v250 = vpop.f32.mrb[0].mxu0
      %v251 = vadd.f32 0.0, %v250
      %v252 = vpop.f32.mrb[0].mxu0
      %v253 = vadd.f32 0.0, %v252
      %254 = vmatprep.mubr.f32.mxu0 0.0
      %255 = vmatmul.mubr.f32.gmra.mrb[0].mxu0 %v182
      %v256 = vpop.f32.mrb[0].mxu0
      %v257 = vadd.f32 0.0, %v256
      %v258 = vpop.f32.mrb[0].mxu0
      %v259 = vadd.f32 0.0, %v258
      %260 = vdwg.mxu0
      %v261 = vadd.f32 %v169, %v251
      %v262 = vadd.f32 %v170, %v253
      %v263 = vadd.f32 %v171, %v257
      %v264 = vadd.f32 %v172, %v259
      %v265 = vld [vmem:[%s4] sm:$0x3]
      %v267 = vlaneseq
      %v268 = vshrl.u32 %v267, 7
      %v269 = vsub.s32 0, %v268
      %v270 = vrot.slane %v265, %v269
      %v271 = vlaneseq
      %v272 = vshrl.u32 %v271, 7
      %v273 = vsub.s32 1, %v272
      %v274 = vrot.slane %v265, %v273
      %v277 = vadd.f32 %v261, %v270
      %v278 = vadd.f32 %v262, %v274
      %v279 = vadd.f32 %v263, %v270
      %v280 = vadd.f32 %v264, %v274
      %v281 = vmax.f32 %v277, 0.0
      %v282 = vmax.f32 %v278, 0.0
      %v283 = vmax.f32 %v279, 0.0
      %v284 = vmax.f32 %v280, 0.0
      %285 = vst [vmem:[#allocation6] sm:$0xff] %v281
      %286 = vst [vmem:[#allocation6 + $0x8] sm:$0xff] %v282
      %287 = vst [vmem:[#allocation6 + $0x10] sm:$0xff] %v283
      %288 = vst [vmem:[#allocation6 + $0x18] sm:$0xff] %v284
    $region33: #{tpu_custom_call.1} parent=1 // pred_fallthru
      _
    // Predicated region
    $region34: #{tpu_custom_call.1} parent=1 // pred_check
      _
    $region35: #{tpu_custom_call.1} parent=1 // pred_check_branch
      %290 = sbr.rel (0) target = $region37
    $region36: #{tpu_custom_call.1} parent=1 // pred_region
      %s292 = ssub.s32 512, 512
      %293 = vsyncadd [#allocation5], %s292
      %s294 = sshll.u32 [#allocation6], 4
      %s295 = int_to_ptr.vmem [resolvable:$true] %s294
      %300 = dma.vmem_to_hbm [thread:$0]  %s295, 512, %s5, [#allocation5], 256, 256, 16
    $region37: #{tpu_custom_call.1} parent=1 // pred_fallthru
      _
    // Predicated region
    $region38: #{tpu_custom_call.1} parent=1 // pred_check
      _
    $region39: #{tpu_custom_call.1} parent=1 // pred_check_branch
      %302 = sbr.rel (0) target = $region41
    $region40: #{tpu_custom_call.1} parent=1 // pred_region
      %303 = dma.done [#allocation5], 512
    $region41: #{tpu_custom_call.1} parent=1 // pred_fallthru
      _
    %304 = vsyncpa [#allocation4], 1
    %305 = vsyncpa [#allocation5], 1

</llo_original>
